<compile_context>
chip_gen: v5e
topology: v5e:2x2
jax: 0.10.0
libtpu: 0.0.40
codegen_flags: <defaults>
</compile_context>

<pallas_src>
import math
import functools

import jax
import jax.numpy as jnp
from jax.experimental import pallas as pl
from jax.experimental.pallas import tpu as pltpu


def ffn_kernel(x_ref, w1_ref, b1_ref, w2_ref, b2_ref, o_ref, acc_ref):
    # x_ref: (tm, D), w1_ref: (D, th), b1_ref: (1, th), w2_ref: (th, D), b2_ref: (1, D)
    # acc_ref: (tm, D) f32 scratch, resident across the hidden-dim grid axis.
    h_idx = pl.program_id(1)

    @pl.when(h_idx == 0)
    def _():
        acc_ref[...] = jnp.zeros_like(acc_ref)

    x = x_ref[...]
    # First linear (f32 accumulation on the MXU) + exact erf GELU (torch.nn.GELU() default).
    h = jnp.dot(x, w1_ref[...], preferred_element_type=jnp.float32)
    h = h + b1_ref[...].astype(jnp.float32)
    h = 0.5 * h * (1.0 + jax.lax.erf(h * (1.0 / math.sqrt(2.0))))
    # Second linear: accumulate this hidden slice's contribution in f32.
    acc_ref[...] += jnp.dot(h.astype(w2_ref.dtype), w2_ref[...],
                            preferred_element_type=jnp.float32)

    @pl.when(h_idx == pl.num_programs(1) - 1)
    def _():
        o_ref[...] = (acc_ref[...] + b2_ref[...].astype(jnp.float32)).astype(o_ref.dtype)


def _pick_hidden_tile(H):
    for cand in (2048, 1024, 512, 256, 128):
        if H % cand == 0:
            return cand
    return H  # small / odd hidden dims: take the whole thing


@functools.partial(jax.jit, static_argnames=("tm", "th", "compute_dtype"))
def feed_forward(x, w1, b1, w2, b2, *, tm=256, th=None, compute_dtype=None):
    """x: (B, S, D). w1: (D, H), b1: (H,), w2: (H, D), b2: (D,). Returns (B, S, D)."""
    B, S, D = x.shape
    H = w1.shape[1]
    M = B * S
    out_dtype = x.dtype

    if compute_dtype is not None:
        x = x.astype(compute_dtype)
        w1 = w1.astype(compute_dtype)
        b1 = b1.astype(compute_dtype)
        w2 = w2.astype(compute_dtype)
        b2 = b2.astype(compute_dtype)

    if th is None:
        th = _pick_hidden_tile(H)
    assert H % th == 0, "hidden tile must divide hidden_dim"

    # Don't use a row tile larger than the (8-rounded) row count; pad rows to a tile multiple.
    tm = min(tm, -(-M // 8) * 8)
    M_pad = -(-M // tm) * tm
    x2 = x.reshape(M, D)
    if M_pad != M:
        x2 = jnp.pad(x2, ((0, M_pad - M), (0, 0)))

    out = pl.pallas_call(
        ffn_kernel,
        out_shape=jax.ShapeDtypeStruct((M_pad, D), out_dtype),
        grid_spec=pltpu.PrefetchScalarGridSpec(
            num_scalar_prefetch=0,
            grid=(M_pad // tm, H // th),
            in_specs=[
                pl.BlockSpec((tm, D), lambda i, h: (i, 0)),   # activation tile
                pl.BlockSpec((D, th), lambda i, h: (0, h)),   # W1 hidden slice
                pl.BlockSpec((1, th), lambda i, h: (0, h)),   # b1 hidden slice
                pl.BlockSpec((th, D), lambda i, h: (h, 0)),   # W2 hidden slice
                pl.BlockSpec((1, D), lambda i, h: (0, 0)),    # b2 (grid-invariant)
            ],
            out_specs=pl.BlockSpec((tm, D), lambda i, h: (i, 0)),
            scratch_shapes=[pltpu.VMEM((tm, D), jnp.float32)],
        ),
        compiler_params=pltpu.CompilerParams(
            dimension_semantics=("parallel", "arbitrary"),
            vmem_limit_bytes=64 * 1024 * 1024,
        ),
    )(x2, w1, b1.reshape(1, H), w2, b2.reshape(1, D))

    if M_pad != M:
        out = out[:M]
    return out.reshape(B, S, D)


def _init_params(key, dim, hidden_dim):
    """Deterministic init mimicking torch.nn.Linear default (uniform +-1/sqrt(fan_in)).
    Weights returned as (in_features, out_features)."""
    k1, k2, k3, k4 = jax.random.split(key, 4)
    bound1 = 1.0 / math.sqrt(dim)
    bound2 = 1.0 / math.sqrt(hidden_dim)
    w1 = jax.random.uniform(k1, (dim, hidden_dim), jnp.float32, -bound1, bound1)
    b1 = jax.random.uniform(k2, (hidden_dim,), jnp.float32, -bound1, bound1)
    w2 = jax.random.uniform(k3, (hidden_dim, dim), jnp.float32, -bound2, bound2)
    b2 = jax.random.uniform(k4, (dim,), jnp.float32, -bound2, bound2)
    return w1, b1, w2, b2


if __name__ == "__main__":
    batch, seq, dim, hidden_dim = 2, 8, 32, 64
    key = jax.random.PRNGKey(0)
    kx, kp = jax.random.split(key)
    x = jax.random.normal(kx, (batch, seq, dim), jnp.float32)
    w1, b1, w2, b2 = _init_params(kp, dim, hidden_dim)

    # Pure-JAX reference (dropout p=0.0 -> identity; exact erf GELU like torch.nn.GELU()).
    ref = jax.nn.gelu(x @ w1 + b1, approximate=False) @ w2 + b2

    # f32 path: must match reference tightly.
    out = jax.block_until_ready(feed_forward(x, w1, b1, w2, b2))
    assert out.shape == (batch, seq, dim)
    assert jnp.allclose(out, ref, atol=1e-5, rtol=1e-5), "f32 mismatch vs reference"

    # bf16 compute path (fast MXU path on v5e/v6e/v7x): looser tolerance.
    out_bf16 = jax.block_until_ready(
        feed_forward(x, w1, b1, w2, b2, compute_dtype=jnp.bfloat16))
    assert out_bf16.shape == (batch, seq, dim)
    assert jnp.allclose(out_bf16.astype(jnp.float32), ref, atol=5e-2, rtol=5e-2), \
        "bf16 mismatch vs reference"

    print("KERNEL_OK")
</pallas_src>

<mosaic_0001>
module attributes {stable_mosaic.version = 11 : i64} {
  func.func @ffn_kernel(%arg0: i32, %arg1: i32, %arg2: memref<16x32xf32, #tpu.memory_space<vmem>>, %arg3: memref<32x64xf32, #tpu.memory_space<vmem>>, %arg4: memref<1x64xf32, #tpu.memory_space<vmem>>, %arg5: memref<64x32xf32, #tpu.memory_space<vmem>>, %arg6: memref<1x32xf32, #tpu.memory_space<vmem>>, %arg7: memref<16x32xf32, #tpu.memory_space<vmem>>, %arg8: memref<16x32xf32, #tpu.memory_space<vmem>>) attributes {dimension_semantics = [#tpu.dimension_semantics<parallel>, #tpu.dimension_semantics<arbitrary>], iteration_bounds = array<i64: 1, 1>, scalar_prefetch = 0 : i64, scratch_operands = 1 : i64, tpu.core_type = #tpu.core_type<tc>, window_params = [{transform_indices = @transform_0, window_bounds = array<i64: 16, 32>}, {transform_indices = @transform_1, window_bounds = array<i64: 32, 64>}, {transform_indices = @transform_2, window_bounds = array<i64: 1, 64>}, {transform_indices = @transform_3, window_bounds = array<i64: 64, 32>}, {pipeline_mode = #tpu.pipeline_mode<synchronous>, transform_indices = @transform_4, window_bounds = array<i64: 1, 32>}, {transform_indices = @transform_5, window_bounds = array<i64: 16, 32>}]} {
    %c0_i32 = arith.constant 0 : i32
    %0 = arith.cmpi eq, %arg1, %c0_i32 : i32
    %1 = arith.extui %0 : i1 to i32
    %c0_i32_0 = arith.constant 0 : i32
    %2 = arith.cmpi ne, %1, %c0_i32_0 : i32
    scf.if %2 {
      %cst_18 = arith.constant 0.000000e+00 : f32
      %25 = vector.broadcast %cst_18 : f32 to vector<16x32xf32>
      %c0_19 = arith.constant 0 : index
      %c0_20 = arith.constant 0 : index
      %26 = vector.load %arg8[%c0_19, %c0_20] : memref<16x32xf32, #tpu.memory_space<vmem>>, vector<16x32xf32>
      tpu.vector_store %arg8[%c0_19, %c0_20], %25 {strides = array<i32>} : memref<16x32xf32, #tpu.memory_space<vmem>>, vector<16x32xf32>,
    } else {
    }
    %c0 = arith.constant 0 : index
    %c0_1 = arith.constant 0 : index
    %3 = vector.load %arg2[%c0, %c0_1] : memref<16x32xf32, #tpu.memory_space<vmem>>, vector<16x32xf32>
    %c0_2 = arith.constant 0 : index
    %c0_3 = arith.constant 0 : index
    %4 = vector.load %arg3[%c0_2, %c0_3] : memref<32x64xf32, #tpu.memory_space<vmem>>, vector<32x64xf32>
    %cst = arith.constant dense<0.000000e+00> : vector<16x64xf32>
    %5 = tpu.matmul %3, %4, %cst {dimension_numbers = #tpu.dot_dimension_numbers<[1], [0], [0], [1], [0, 0, 1, 1], [], []>} : vector<16x32xf32>, vector<32x64xf32>, vector<16x64xf32> -> vector<16x64xf32>
    %c0_4 = arith.constant 0 : index
    %c0_5 = arith.constant 0 : index
    %6 = vector.load %arg4[%c0_4, %c0_5] : memref<1x64xf32, #tpu.memory_space<vmem>>, vector<1x64xf32>
    %7 = vector.broadcast %6 : vector<1x64xf32> to vector<16x64xf32>
    %8 = arith.addf %5, %7 : vector<16x64xf32>
    %cst_6 = arith.constant 5.000000e-01 : f32
    %9 = vector.broadcast %cst_6 : f32 to vector<16x64xf32>
    %10 = arith.mulf %9, %8 : vector<16x64xf32>
    %cst_7 = arith.constant 0.707106769 : f32
    %11 = vector.broadcast %cst_7 : f32 to vector<16x64xf32>
    %12 = arith.mulf %8, %11 : vector<16x64xf32>
    %13 = math.erf %12 : vector<16x64xf32>
    %cst_8 = arith.constant 1.000000e+00 : f32
    %14 = vector.broadcast %cst_8 : f32 to vector<16x64xf32>
    %15 = arith.addf %14, %13 : vector<16x64xf32>
    %16 = arith.mulf %10, %15 : vector<16x64xf32>
    %c0_9 = arith.constant 0 : index
    %c0_10 = arith.constant 0 : index
    %17 = vector.load %arg8[%c0_9, %c0_10] : memref<16x32xf32, #tpu.memory_space<vmem>>, vector<16x32xf32>
    %c0_11 = arith.constant 0 : index
    %c0_12 = arith.constant 0 : index
    %18 = vector.load %arg5[%c0_11, %c0_12] : memref<64x32xf32, #tpu.memory_space<vmem>>, vector<64x32xf32>
    %cst_13 = arith.constant dense<0.000000e+00> : vector<16x32xf32>
    %19 = tpu.matmul %16, %18, %cst_13 {dimension_numbers = #tpu.dot_dimension_numbers<[1], [0], [0], [1], [0, 0, 1, 1], [], []>} : vector<16x64xf32>, vector<64x32xf32>, vector<16x32xf32> -> vector<16x32xf32>
    %20 = arith.addf %17, %19 : vector<16x32xf32>
    %c0_14 = arith.constant 0 : index
    %c0_15 = arith.constant 0 : index
    %21 = vector.load %arg8[%c0_14, %c0_15] : memref<16x32xf32, #tpu.memory_space<vmem>>, vector<16x32xf32>
    tpu.vector_store %arg8[%c0_14, %c0_15], %20 {strides = array<i32>} : memref<16x32xf32, #tpu.memory_space<vmem>>, vector<16x32xf32>,
    %c0_i32_16 = arith.constant 0 : i32
    %22 = arith.cmpi eq, %arg1, %c0_i32_16 : i32
    %23 = arith.extui %22 : i1 to i32
    %c0_i32_17 = arith.constant 0 : i32
    %24 = arith.cmpi ne, %23, %c0_i32_17 : i32
    scf.if %24 {
      %c0_18 = arith.constant 0 : index
      %c0_19 = arith.constant 0 : index
      %25 = vector.load %arg8[%c0_18, %c0_19] : memref<16x32xf32, #tpu.memory_space<vmem>>, vector<16x32xf32>
      %c0_20 = arith.constant 0 : index
      %c0_21 = arith.constant 0 : index
      %26 = vector.load %arg6[%c0_20, %c0_21] : memref<1x32xf32, #tpu.memory_space<vmem>>, vector<1x32xf32>
      %27 = vector.broadcast %26 : vector<1x32xf32> to vector<16x32xf32>
      %28 = arith.addf %25, %27 : vector<16x32xf32>
      %c0_22 = arith.constant 0 : index
      %c0_23 = arith.constant 0 : index
      %29 = vector.load %arg7[%c0_22, %c0_23] : memref<16x32xf32, #tpu.memory_space<vmem>>, vector<16x32xf32>
      tpu.vector_store %arg7[%c0_22, %c0_23], %28 {strides = array<i32>} : memref<16x32xf32, #tpu.memory_space<vmem>>, vector<16x32xf32>,
    } else {
    }
    return
  }
  func.func @transform_0(%arg0: i32, %arg1: i32) -> (i32, i32) {
    %c0_i32 = arith.constant 0 : i32
    %c0_i32_0 = arith.constant 0 : i32
    return %arg0, %c0_i32 : i32, i32
  }
  func.func @transform_1(%arg0: i32, %arg1: i32) -> (i32, i32) {
    %c0_i32 = arith.constant 0 : i32
    %c0_i32_0 = arith.constant 0 : i32
    return %c0_i32, %arg1 : i32, i32
  }
  func.func @transform_2(%arg0: i32, %arg1: i32) -> (i32, i32) {
    %c0_i32 = arith.constant 0 : i32
    %c0_i32_0 = arith.constant 0 : i32
    return %c0_i32, %arg1 : i32, i32
  }
  func.func @transform_3(%arg0: i32, %arg1: i32) -> (i32, i32) {
    %c0_i32 = arith.constant 0 : i32
    %c0_i32_0 = arith.constant 0 : i32
    return %arg1, %c0_i32 : i32, i32
  }
  func.func @transform_4(%arg0: i32, %arg1: i32) -> (i32, i32) {
    %c0_i32 = arith.constant 0 : i32
    %c0_i32_0 = arith.constant 0 : i32
    %c0_i32_1 = arith.constant 0 : i32
    return %c0_i32, %c0_i32_0 : i32, i32
  }
  func.func @transform_5(%arg0: i32, %arg1: i32) -> (i32, i32) {
    %c0_i32 = arith.constant 0 : i32
    %c0_i32_0 = arith.constant 0 : i32
    return %arg0, %c0_i32 : i32, i32
  }
}

</mosaic_0001>

<llo_original>
// kernel: feed_forward.1
$region0: #{feed_forward.1}
  #allocation0 [shape = 'u32[]', space=smem, size = 0x4, offset = 0x4, fixed_abs, tag = 'smem constant byte address 0x4 - core index']
  #allocation1 [shape = 'u32[72,128]{1,0:T(1,128)}', space=vmem, size = 0x9000, scoped, tag = 'internal scratch']
  #allocation2 [shape = 'f32[16,32]{1,0:T(8,128)}', space=vmem, size = 0x2000, scoped, tag = 'scratch operand']
  %s0 = inlined_call_operand.vmem [shape: f32[16,32], index: 0, kind: input, shape index: {}]
  %s1 = inlined_call_operand.vmem [shape: f32[32,64], index: 1, kind: input, shape index: {}]
  %s2 = inlined_call_operand.vmem [shape: f32[1,64], index: 2, kind: input, shape index: {}]
  %s3 = inlined_call_operand.vmem [shape: f32[64,32], index: 3, kind: input, shape index: {}]
  %s4 = inlined_call_operand.vmem [shape: f32[1,32], index: 4, kind: input, shape index: {}]
  %s5 = inlined_call_operand.hbm [shape: f32[16,32], index: 5, kind: output, shape index: {}]
  %s6 = sld [smem:[#allocation0]]
  $region38: #{feed_forward.1} parent=0
    _
  %s8 = ssub.s32 1, %s6
  %s9 = scalar_select 0, %s8, %s6
  $region1: #{feed_forward.1} parent=0
    #allocation3 [shape = 'u8[8192]{0}', space=vmem, size = 0x2000, scoped, tag = 'output window, operand 0, single buffered']
    #allocation4 [shape = 's32[1]{0}', space=sflag, size = 0x4, scoped, tag = 'scoped memory for feed_forward.1']
    %10 = vsyncpa [#allocation4], 0
    // Predicated region
    $region2: #{feed_forward.1} parent=1 // pred_check
      _
    $region3: #{feed_forward.1} parent=1 // pred_check_branch
      %12 = sbr.rel (0) target = $region5
    $region4: #{feed_forward.1} parent=1 // pred_region
      _
    $region5: #{feed_forward.1} parent=1 // pred_fallthru
      _
    // Predicated region
    $region6: #{feed_forward.1} parent=1 // pred_check
      _
    $region7: #{feed_forward.1} parent=1 // pred_check_branch
      %14 = sbr.rel (0) target = $region9
    $region8: #{feed_forward.1} parent=1 // pred_region
      _
    $region9: #{feed_forward.1} parent=1 // pred_fallthru
      _
    // Predicated region
    $region10: #{feed_forward.1} parent=1 // pred_check
      _
    $region11: #{feed_forward.1} parent=1 // pred_check_branch
      %16 = sbr.rel (0) target = $region13
    $region12: #{feed_forward.1} parent=1 // pred_region
      _
    $region13: #{feed_forward.1} parent=1 // pred_fallthru
      _
    // Predicated region
    $region14: #{feed_forward.1} parent=1 // pred_check
      _
    $region15: #{feed_forward.1} parent=1 // pred_check_branch
      %18 = sbr.rel (0) target = $region17
    $region16: #{feed_forward.1} parent=1 // pred_region
      _
    $region17: #{feed_forward.1} parent=1 // pred_fallthru
      _
    // Predicated region
    $region18: #{feed_forward.1} parent=1 // pred_check
      _
    $region19: #{feed_forward.1} parent=1 // pred_check_branch
      %20 = sbr.rel (0) target = $region21
    $region20: #{feed_forward.1} parent=1 // pred_region
      _
    $region21: #{feed_forward.1} parent=1 // pred_fallthru
      _
    %p21 = scmp.eq.s32.totalorder 0, 0
    // Predicated region
    $region22: #{feed_forward.1} parent=1 // pred_check
      %p22 = pneg %p21
    $region23: #{feed_forward.1} parent=1 // pred_check_branch
      %24 = sbr.rel (%p22) target = $region25
    $region24: #{feed_forward.1} parent=1 // pred_region
      %vm25 = vcmask 261120
      %26 = vst.msk [vmem:[#allocation2] sm:$0xff] %vm25, 0.0
      %27 = vst.msk [vmem:[#allocation2 + $0x8] sm:$0xff] %vm25, 0.0
    $region25: #{feed_forward.1} parent=1 // pred_fallthru
      _
    %v28 = vld [vmem:[%s0] sm:$0xff]
    %v29 = vld [vmem:[%s0 + $0x8] sm:$0xff]
    %v30 = vld [vmem:[%s1] sm:$0xff]
    %v31 = vld [vmem:[%s1 + $0x8] sm:$0xff]
    %v32 = vld [vmem:[%s1 + $0x10] sm:$0xff]
    %v33 = vld [vmem:[%s1 + $0x18] sm:$0xff]
    %v34 = vld [vmem:[%s2] sm:$0x1]
    %v36 = vperm.slane %v34, 0
    %vm38 = vcmask 261120
    %v40 = vsel %vm38, %v28, 0
    %v43 = vsel %vm38, %v29, 0
    %45 = vmatpush.msra.mxu0 0.0
    %46 = vmatpush.msra.mxu0 0.0
    %47 = vmatpush.msra.mxu0 0.0
    %48 = vmatpush.msra.mxu0 0.0
    %49 = vmatpush.msra.mxu0 0.0
    %50 = vmatpush.msra.mxu0 0.0
    %51 = vmatpush.msra.mxu0 0.0
    %52 = vmatpush.msra.mxu0 0.0
    %53 = vmatpush.msra.mxu0 0.0
    %54 = vmatpush.msra.mxu0 0.0
    %55 = vmatpush.msra.mxu0 0.0
    %56 = vmatpush.msra.mxu0 0.0
    %57 = vmatpush.msra.mxu0 %v33
    %58 = vmatpush.msra.mxu0 %v32
    %59 = vmatpush.msra.mxu0 %v31
    %60 = vmatpush.msra.mxu0 %v30
    %61 = vmatmul.f32.gmra.mxu0 %v40
    %v62 = vpop.f32.mrf.mxu0
    %v63 = vadd.f32 %v36, %v62
    %64 = vmatmul.f32.gmra.mxu0 %v43
    %v65 = vpop.f32.mrf.mxu0
    %v66 = vadd.f32 %v36, %v65
    %67 = vdwg.mxu0
    %v68 = vmul.f32 %v63, 0.5
    %v69 = vmul.f32 %v66, 0.5
    %v70 = vmul.f32 %v63, 0.70710677
    %v71 = vmul.f32 %v66, 0.70710677
    %v72 = vmul.f32 %v70, %v70
    %v73 = vmin.f32 16.0, %v72
    %v74 = vmul.f32 %v73, 2.1237322e-06
    %v75 = vadd.f32 %v74, 0.00028619796
    %v76 = vmul.f32 %v73, %v75
    %v77 = vadd.f32 %v76, 0.0036580483
    %v78 = vmul.f32 %v73, %v77
    %v79 = vadd.f32 %v78, 0.05243302
    %v80 = vmul.f32 %v73, %v79
    %v81 = vadd.f32 %v80, 0.18741608
    %v82 = vmul.f32 %v73, %v81
    %v83 = vadd.f32 %v82, 1.1283791
    %v84 = vmul.f32 %v70, %v83
    %v85 = vmul.f32 %v73, 3.8918573e-05
    %v86 = vadd.f32 %v85, 0.001143296
    %v87 = vmul.f32 %v73, %v86
    %v88 = vadd.f32 %v87, 0.014752088
    %v89 = vmul.f32 %v73, %v88
    %v90 = vadd.f32 %v89, 0.112945676
    %v91 = vmul.f32 %v73, %v90
    %v92 = vadd.f32 %v91, 0.4994258
    %v93 = vmul.f32 %v73, %v92
    %v94 = vadd.f32 %v93, 1.0
    %v95 = vrcp.pop %v94
    %v96 = vmul.f32 %v94, %v95
    %v97 = vsub.f32 1.0, %v96
    %v98 = vmul.f32 %v95, %v97
    %v99 = vadd.f32 %v95, %v98
    %vm100 = vweird.f32 %v94
    %vm101 = vweird.f32 %v95
    %vm102 = vmor %vm100, %vm101
    %v103 = vsel %vm102, %v95, %v99
    %v104 = vand.u32 2147483647, %v94
    %vm105 = vcmp.eq.f32.partialorder %v104, 8.507059e+37
    %v106 = vand.u32 %v94, 2147483648
    %v107 = vor.u32 1.1754944e-38, %v106
    %v108 = vsel %vm105, %v107, %v103
    %v109 = vmul.f32 %v84, %v108
    %v110 = vmin.f32 %v109, 1.0
    %v111 = vmax.f32 %v110, -1.0
    %v112 = vmul.f32 %v71, %v71
    %v113 = vmin.f32 16.0, %v112
    %v114 = vmul.f32 %v113, 2.1237322e-06
    %v115 = vadd.f32 %v114, 0.00028619796
    %v116 = vmul.f32 %v113, %v115
    %v117 = vadd.f32 %v116, 0.0036580483
    %v118 = vmul.f32 %v113, %v117
    %v119 = vadd.f32 %v118, 0.05243302
    %v120 = vmul.f32 %v113, %v119
    %v121 = vadd.f32 %v120, 0.18741608
    %v122 = vmul.f32 %v113, %v121
    %v123 = vadd.f32 %v122, 1.1283791
    %v124 = vmul.f32 %v71, %v123
    %v125 = vmul.f32 %v113, 3.8918573e-05
    %v126 = vadd.f32 %v125, 0.001143296
    %v127 = vmul.f32 %v113, %v126
    %v128 = vadd.f32 %v127, 0.014752088
    %v129 = vmul.f32 %v113, %v128
    %v130 = vadd.f32 %v129, 0.112945676
    %v131 = vmul.f32 %v113, %v130
    %v132 = vadd.f32 %v131, 0.4994258
    %v133 = vmul.f32 %v113, %v132
    %v134 = vadd.f32 %v133, 1.0
    %v135 = vrcp.pop %v134
    %v136 = vmul.f32 %v134, %v135
    %v137 = vsub.f32 1.0, %v136
    %v138 = vmul.f32 %v135, %v137
    %v139 = vadd.f32 %v135, %v138
    %vm140 = vweird.f32 %v134
    %vm141 = vweird.f32 %v135
    %vm142 = vmor %vm140, %vm141
    %v143 = vsel %vm142, %v135, %v139
    %v144 = vand.u32 2147483647, %v134
    %vm145 = vcmp.eq.f32.partialorder %v144, 8.507059e+37
    %v146 = vand.u32 %v134, 2147483648
    %v147 = vor.u32 1.1754944e-38, %v146
    %v148 = vsel %vm145, %v147, %v143
    %v149 = vmul.f32 %v124, %v148
    %v150 = vmin.f32 %v149, 1.0
    %v151 = vmax.f32 %v150, -1.0
    %v152 = vadd.f32 %v111, 1.0
    %v153 = vadd.f32 %v151, 1.0
    %v154 = vmul.f32 %v68, %v152
    %v155 = vmul.f32 %v69, %v153
    %v156 = vld [vmem:[#allocation2] sm:$0xff]
    %v157 = vld [vmem:[#allocation2 + $0x8] sm:$0xff]
    %v158 = vld [vmem:[%s3] sm:$0xff]
    %v159 = vld [vmem:[%s3 + $0x8] sm:$0xff]
    %v160 = vld [vmem:[%s3 + $0x10] sm:$0xff]
    %v161 = vld [vmem:[%s3 + $0x18] sm:$0xff]
    %v162 = vld [vmem:[%s3 + $0x20] sm:$0xff]
    %v163 = vld [vmem:[%s3 + $0x28] sm:$0xff]
    %v164 = vld [vmem:[%s3 + $0x30] sm:$0xff]
    %v165 = vld [vmem:[%s3 + $0x38] sm:$0xff]
    %vm166 = vcmask 523264
    %v168 = vsel %vm166, %v154, 0
    %v171 = vsel %vm166, %v155, 0
    %173 = vmatpush.msra.mxu0 0.0
    %174 = vmatpush.msra.mxu0 0.0
    %175 = vmatpush.msra.mxu0 0.0
    %176 = vmatpush.msra.mxu0 0.0
    %177 = vmatpush.msra.mxu0 0.0
    %178 = vmatpush.msra.mxu0 0.0
    %179 = vmatpush.msra.mxu0 0.0
    %180 = vmatpush.msra.mxu0 0.0
    %181 = vmatpush.msra.mxu0 %v165
    %182 = vmatpush.msra.mxu0 %v164
    %183 = vmatpush.msra.mxu0 %v163
    %184 = vmatpush.msra.mxu0 %v162
    %185 = vmatpush.msra.mxu0 %v161
    %186 = vmatpush.msra.mxu0 %v160
    %187 = vmatpush.msra.mxu0 %v159
    %188 = vmatpush.msra.mxu0 %v158
    %189 = vmatmul.f32.gmra.mxu0 %v168
    %v190 = vpop.f32.mrf.mxu0
    %v191 = vadd.f32 0.0, %v190
    %192 = vmatmul.f32.gmra.mxu0 %v171
    %v193 = vpop.f32.mrf.mxu0
    %v194 = vadd.f32 0.0, %v193
    %195 = vdwg.mxu0
    %v196 = vadd.f32 %v156, %v191
    %v197 = vadd.f32 %v157, %v194
    %198 = vst.msk [vmem:[#allocation2] sm:$0xff] %vm38, %v196
    %199 = vst.msk [vmem:[#allocation2 + $0x8] sm:$0xff] %vm38, %v197
    // Predicated region
    $region26: #{feed_forward.1} parent=1 // pred_check
      %p200 = pneg %p21
    $region27: #{feed_forward.1} parent=1 // pred_check_branch
      %202 = sbr.rel (%p200) target = $region29
    $region28: #{feed_forward.1} parent=1 // pred_region
      %v203 = vld [vmem:[#allocation2] sm:$0xff]
      %v204 = vld [vmem:[#allocation2 + $0x8] sm:$0xff]
      %v205 = vld [vmem:[%s4] sm:$0x1]
      %v207 = vperm.slane %v205, 0
      %v209 = vadd.f32 %v203, %v207
      %v210 = vadd.f32 %v204, %v207
      %211 = vst.msk [vmem:[#allocation3] sm:$0xff] %vm38, %v209
      %212 = vst.msk [vmem:[#allocation3 + $0x8] sm:$0xff] %vm38, %v210
    $region29: #{feed_forward.1} parent=1 // pred_fallthru
      _
    // Predicated region
    $region30: #{feed_forward.1} parent=1 // pred_check
      _
    $region31: #{feed_forward.1} parent=1 // pred_check_branch
      %214 = sbr.rel (0) target = $region33
    $region32: #{feed_forward.1} parent=1 // pred_region
      %216 = vsyncadd [#allocation4], 0
      %s217 = sshll.u32 [#allocation3], 4
      %s218 = int_to_ptr.vmem [resolvable:$true] %s217
      %s219 = sshll.u32 %s5, 4
      %s220 = int_to_ptr.hbm [resolvable:$true] %s219
      %225 = dma.vmem_to_hbm [thread:$0]  %s218, 256, %s220, [#allocation4], 128, 128, 8
    $region33: #{feed_forward.1} parent=1 // pred_fallthru
      _
    // Predicated region
    $region34: #{feed_forward.1} parent=1 // pred_check
      _
    $region35: #{feed_forward.1} parent=1 // pred_check_branch
      %227 = sbr.rel (0) target = $region37
    $region36: #{feed_forward.1} parent=1 // pred_region
      %229 = dma.done [#allocation4], 256
    $region37: #{feed_forward.1} parent=1 // pred_fallthru
      _
    %230 = vsyncpa [#allocation4], 1

</llo_original>
